<compile_context>
chip_gen: v7x
topology: tpu7x:2x2x1
jax: 0.10.0
libtpu: 0.0.40
codegen_flags: <defaults>
</compile_context>

<pallas_src>
import functools

import jax
import jax.numpy as jnp
from jax.experimental import pallas as pl
from jax.experimental.pallas import tpu as pltpu


def _graph_filter_kernel(x_ref, st_hbm, w_ref, b_ref, o_ref, st_vmem, z_ref, *,
                         n_edges, k_taps, f_in, b_blk):
    """One batch block (B_blk batch elements) per grid step.

    x_ref  : (1, N, B_blk*G)       batch-packed inputs, column b*G+g = (local batch b, feat g)
    st_hbm : (E*N, N)   [HBM/ANY]  pre-transposed, row-stacked GSOs (grid-invariant)
    w_ref  : (C, Fp)               fused tap weights: k=0 edge-summed block, then (k, e, g)
    b_ref  : (1, Fp)               bias row (f32, lanes zero-padded)
    o_ref  : (1, B_blk*N, Fp)      output, row b*N + n = (local batch b, node n)
    st_vmem: (E*N, N)   scratch    single-buffered VMEM copy of the GSOs
    z_ref  : (B_blk*N, C) scratch  assembled Z operand of the deferred tap matmul
    """
    n_nodes = st_vmem.shape[1]
    g = f_in

    # Single-buffer the grid-invariant GSO: DMA HBM -> VMEM once per core.
    # Gating on the *inner* (sequential/"arbitrary") grid index is megacore-
    # safe: every core that picks up a slice of the outer "parallel" axis
    # still executes j == 0 (unlike a global program_id == 0 condition).
    @pl.when(pl.program_id(1) == 0)
    def _():
        pltpu.sync_copy(st_hbm, st_vmem)

    st = st_vmem[...]            # hoisted once; reused by every tap matmul
    x0 = x_ref[0]                # (N, B_blk*G)

    # k = 0 columns of Z (x replicated over edges; the e-sum is folded into W).
    for b in range(b_blk):
        z_ref[b * n_nodes:(b + 1) * n_nodes, 0:g] = x0[:, b * g:(b + 1) * g]

    # Diffusion recursion: one fused (E*N, N) x (N, B_blk*G) MXU call per tap;
    # the batch block rides the lane axis so the MXU RHS is >= 128 lanes wide.
    prev = x0
    for k in range(1, k_taps):
        cur = jnp.dot(st, prev, preferred_element_type=jnp.float32)  # (E*N, B_blk*G)
        cur = cur.astype(z_ref.dtype)
        for b in range(b_blk):
            for e in range(n_edges):
                off = g + (k - 1) * n_edges * g + e * g
                z_ref[b * n_nodes:(b + 1) * n_nodes, off:off + g] = (
                    cur[e * n_nodes:(e + 1) * n_nodes, b * g:(b + 1) * g])
        # Faithful PyTorch quirk: the next hop re-uses only the edge-0 result.
        prev = cur[0:n_nodes, :]

    # Deferred tap matmul: one MXU call over contraction C = G + (K-1)*E*G,
    # bias folded into the f32 epilogue, lane-dense unmasked output store.
    acc = jnp.dot(z_ref[...], w_ref[...],
                  preferred_element_type=jnp.float32) + b_ref[...]
    o_ref[0] = acc.astype(o_ref.dtype)


def graph_filter_pallas(x, s_stack, weight, bias, *, compute_dtype=jnp.bfloat16):
    """x: (B, N, G); s_stack: (E, N, N); weight: (F, E, K, G); bias: (F, 1).

    compute_dtype: dtype of the MXU operands (x, GSO, fused W, Z).  bf16 is the
    native MXU input dtype on v5e/v6e/v7x; accumulation stays f32.  Use
    jnp.float32 for a bit-strict path.
    """
    B, N, G = x.shape
    F, E, K, G2 = weight.shape
    assert G2 == G and s_stack.shape == (E, N, N)
    out_dtype = x.dtype

    # ---- trace-time (free) layout work -------------------------------------
    # Pre-transpose + row-stack the GSOs so the per-tap diffusion over all E
    # edges is one matmul with no in-kernel transpose.
    st_flat = jnp.swapaxes(s_stack, 1, 2).reshape(E * N, N).astype(compute_dtype)

    # torch quirk: h.reshape(E*K*G, F) raw-reinterprets the (F, E, K, G)
    # buffer, i.e. the effective per-(e, k) tap is w4[e, k].  Do NOT "fix" it.
    w4 = weight.reshape(E, K, G, F)
    w0 = jnp.sum(w4[:, 0], axis=0)                                    # (G, F)
    if K > 1:
        w_rest = jnp.transpose(w4[:, 1:], (1, 0, 2, 3)).reshape((K - 1) * E * G, F)
        w_full = jnp.concatenate([w0, w_rest], axis=0)                # (C, F)
    else:
        w_full = w0
    C = w_full.shape[0]

    F_pad = pl.cdiv(F, 128) * 128
    # TODO(synk): on v5e with F << 128 and very large B*N, the padded
    # writeback + post-call slice inflates output HBM traffic ~F_pad/F x;
    # consider consuming the padded buffer downstream instead.
    w_full = jnp.pad(w_full, ((0, 0), (0, F_pad - F))).astype(compute_dtype)
    b_row = jnp.pad(bias.reshape(1, F).astype(jnp.float32),
                    ((0, 0), (0, F_pad - F)))

    # ---- batch blocking -----------------------------------------------------
    c_item = jnp.dtype(compute_dtype).itemsize
    o_item = jnp.dtype(out_dtype).itemsize
    # Fill the MXU lane axis (>= 128 lanes) but keep >= 2 batch blocks when
    # B >= 2 so the "parallel" grid axis can feed both v7x TensorCores.
    b_blk = max(1, 128 // max(G, 1))
    b_blk = min(b_blk, pl.cdiv(B, 2)) if B >= 2 else 1
    # Cap by a rough per-batch VMEM budget (double-buffered out + Z + x).
    per_batch = N * (2 * F_pad * o_item + C * c_item + 2 * G * c_item)
    b_blk = max(1, min(b_blk, (8 * 2**20) // max(1, per_batch)))

    nb = pl.cdiv(B, b_blk)
    lead = 2 if nb >= 2 else 1
    inner = pl.cdiv(nb, lead)
    nb_pad = lead * inner
    b_pad = nb_pad * b_blk

    xp = x.astype(compute_dtype)
    if b_pad != B:
        xp = jnp.pad(xp, ((0, b_pad - B), (0, 0), (0, 0)))
    # Pack each batch block onto the lane axis: (nb_pad, N, B_blk*G),
    # column b*G + g holds (local batch b, feature g).
    x_packed = (xp.reshape(nb_pad, b_blk, N, G)
                  .transpose(0, 2, 1, 3)
                  .reshape(nb_pad, N, b_blk * G))

    # ---- VMEM budget, clamped to the actual chip ----------------------------
    try:
        vmem_cap = int(pltpu.get_tpu_info().vmem_capacity_bytes)
    except Exception:   # conservative fallback = v7x per-TC capacity
        vmem_cap = 64 * 2**20
    resident = (E * N * N * c_item                    # GSO scratch (single buffer)
                + b_blk * N * C * c_item              # Z scratch
                + 2 * N * b_blk * G * c_item          # x blocks (double-buffered)
                + 2 * b_blk * N * F_pad * o_item      # out blocks (double-buffered)
                + 2 * C * F_pad * c_item              # fused-W blocks
                + 2 * F_pad * 4)                      # bias blocks
    vmem_limit = int(min(int(0.8 * vmem_cap), max(8 * 2**20, 4 * resident)))
    # TODO(synk): for very large N (E*N*N*c_item beyond the budget) add a
    # contraction-tiled path (extra "arbitrary" grid axis / emit_pipeline over
    # node tiles of the GSO) instead of keeping the whole GSO VMEM-resident.

    kernel = functools.partial(_graph_filter_kernel, n_edges=E, k_taps=K,
                               f_in=G, b_blk=b_blk)

    y_pad = pl.pallas_call(
        kernel,
        out_shape=jax.ShapeDtypeStruct((nb_pad, b_blk * N, F_pad), out_dtype),
        grid_spec=pltpu.PrefetchScalarGridSpec(
            num_scalar_prefetch=0,
            grid=(lead, inner),
            in_specs=[
                pl.BlockSpec((1, N, b_blk * G), lambda i, j: (i * inner + j, 0, 0)),
                # GSO stays in HBM; the kernel DMAs it once per core into a
                # single-buffered VMEM scratch (no 2x pipeline buffering).
                pl.BlockSpec(memory_space=pl.ANY),
                pl.BlockSpec((C, F_pad), lambda i, j: (0, 0)),
                pl.BlockSpec((1, F_pad), lambda i, j: (0, 0)),
            ],
            out_specs=pl.BlockSpec((1, b_blk * N, F_pad),
                                   lambda i, j: (i * inner + j, 0, 0)),
            scratch_shapes=[
                pltpu.VMEM((E * N, N), compute_dtype),      # GSO (single buffer)
                pltpu.VMEM((b_blk * N, C), compute_dtype),  # Z assembly
            ]),
        compiler_params=pltpu.CompilerParams(
            dimension_semantics=("parallel", "arbitrary"),
            vmem_limit_bytes=vmem_limit),
    )(x_packed, st_flat, w_full, b_row)

    y = y_pad.reshape(b_pad, N, F_pad)[:B, :, :F]
    return y.astype(out_dtype)


def graph_filter_ref(x, s_stack, weight, bias):
    """Pure-JAX f32 port of the PyTorch forward (including its quirks)."""
    B, N, G = x.shape
    F, E, K, _ = weight.shape
    hp = functools.partial(jnp.einsum, precision="highest")

    xp = jnp.transpose(x, (0, 2, 1))                       # (B, G, N)
    z = jnp.broadcast_to(xp[:, None, None], (B, E, 1, G, N))
    cur = xp[:, None]                                      # (B, 1, G, N)
    for _ in range(1, K):
        x_new = hp("bgm,emn->begn", cur[:, 0], s_stack)    # (B, E, G, N)
        cur = x_new
        z = jnp.concatenate([z, x_new[:, :, None]], axis=2)
    zz = jnp.transpose(z, (0, 4, 1, 2, 3)).reshape(B, N, E * K * G)
    y = hp("bnc,cf->bnf", zz, weight.reshape(E * K * G, F))
    y = jnp.transpose(y, (0, 2, 1)) + bias                 # (B, F, N) + (F, 1)
    return jnp.transpose(y, (0, 2, 1))                     # (B, N, F)


if __name__ == "__main__":
    B, N = 2, 16             # batch, number of graph nodes
    G, F, E, K = 4, 8, 2, 3  # f_in, f_out, f_edge, filter taps

    key = jax.random.PRNGKey(0)
    kx, ks, kw, kb = jax.random.split(key, 4)

    x = jax.random.normal(kx, (B, N, G), jnp.float32)
    s_stack = jax.random.normal(ks, (E, N, N), jnp.float32) * 0.3
    # torch.nn.init.normal_(weight, 0, 3); bias normal_(0, 3)
    weight = jax.random.normal(kw, (F, E, K, G), jnp.float32) * 3.0
    bias = jax.random.normal(kb, (F, 1), jnp.float32) * 3.0

    y_ref = jax.block_until_ready(graph_filter_ref(x, s_stack, weight, bias))

    # Bit-strict f32 path: checks the layout / fused-weight bookkeeping exactly.
    y_f32 = jax.block_until_ready(
        graph_filter_pallas(x, s_stack, weight, bias, compute_dtype=jnp.float32))
    assert y_f32.shape == (B, N, F), y_f32.shape
    if not jnp.allclose(y_f32, y_ref, rtol=2e-3, atol=2e-3):
        raise AssertionError(
            f"f32 mismatch: max abs err = {float(jnp.max(jnp.abs(y_f32 - y_ref)))}")

    # Default bf16 MXU path: f32 accumulation, so check normalized error.
    y_bf16 = jax.block_until_ready(graph_filter_pallas(x, s_stack, weight, bias))
    assert y_bf16.shape == (B, N, F), y_bf16.shape
    err = float(jnp.max(jnp.abs(y_bf16 - y_ref)))
    scale = float(jnp.maximum(1.0, jnp.max(jnp.abs(y_ref))))
    if err / scale > 2e-2:
        raise AssertionError(f"bf16 mismatch: normalized max err = {err / scale}")

    print("KERNEL_OK")
</pallas_src>

<mosaic_0001>
module attributes {stable_mosaic.version = 11 : i64} {
  func.func @_graph_filter_kernel(%arg0: i32, %arg1: i32, %arg2: memref<1x16x4xf32, #tpu.memory_space<vmem>>, %arg3: memref<32x16xf32, #tpu.memory_space<any>>, %arg4: memref<20x128xf32, #tpu.memory_space<vmem>>, %arg5: memref<1x128xf32, #tpu.memory_space<vmem>>, %arg6: memref<1x16x128xf32, #tpu.memory_space<vmem>>, %arg7: memref<32x16xf32, #tpu.memory_space<vmem>>, %arg8: memref<16x20xf32, #tpu.memory_space<vmem>>) attributes {dimension_semantics = [#tpu.dimension_semantics<parallel>, #tpu.dimension_semantics<arbitrary>], iteration_bounds = array<i64: 2, 1>, scalar_prefetch = 0 : i64, scratch_operands = 2 : i64, tpu.core_type = #tpu.core_type<tc>, window_params = [{transform_indices = @transform_0, window_bounds = array<i64: 1, 16, 4>}, {}, {pipeline_mode = #tpu.pipeline_mode<synchronous>, transform_indices = @transform_2, window_bounds = array<i64: 20, 128>}, {pipeline_mode = #tpu.pipeline_mode<synchronous>, transform_indices = @transform_3, window_bounds = array<i64: 1, 128>}, {transform_indices = @transform_4, window_bounds = array<i64: 1, 16, 128>}]} {
    %c0_i32 = arith.constant 0 : i32
    %0 = arith.cmpi eq, %arg1, %c0_i32 : i32
    %1 = arith.extui %0 : i1 to i32
    %c0_i32_0 = arith.constant 0 : i32
    %2 = arith.cmpi ne, %1, %c0_i32_0 : i32
    scf.if %2 {
      "tpu.region"() ({
        %27 = tpu.sem_alloc : memref<!tpu.dma_semaphore, #tpu.memory_space<semaphore_mem>>
        tpu.enqueue_dma source(%arg3 : memref<32x16xf32, #tpu.memory_space<any>>) target(%arg7 : memref<32x16xf32, #tpu.memory_space<vmem>>) target_semaphore(%27 : memref<!tpu.dma_semaphore, #tpu.memory_space<semaphore_mem>>)
        tpu.wait_dma2 semaphore(%27 : memref<!tpu.dma_semaphore, #tpu.memory_space<semaphore_mem>>) src(%arg3 : memref<32x16xf32, #tpu.memory_space<any>>) dst(%arg7 : memref<32x16xf32, #tpu.memory_space<vmem>>)
        tpu.yield
      }) : () -> ()
    } else {
    }
    %c0 = arith.constant 0 : index
    %c0_1 = arith.constant 0 : index
    %3 = vector.load %arg7[%c0, %c0_1] : memref<32x16xf32, #tpu.memory_space<vmem>>, vector<32x16xf32>
    %c0_2 = arith.constant 0 : index
    %c0_3 = arith.constant 0 : index
    %c0_4 = arith.constant 0 : index
    %4 = vector.load %arg2[%c0_2, %c0_3, %c0_4] : memref<1x16x4xf32, #tpu.memory_space<vmem>>, vector<1x16x4xf32>
    %5 = vector.shape_cast %4 : vector<1x16x4xf32> to vector<16x4xf32>
    %c0_5 = arith.constant 0 : index
    %c0_6 = arith.constant 0 : index
    %6 = vector.load %arg8[%c0_5, %c0_6] : memref<16x20xf32, #tpu.memory_space<vmem>>, vector<16x4xf32>
    tpu.vector_store %arg8[%c0_5, %c0_6], %5 {strides = array<i32>} : memref<16x20xf32, #tpu.memory_space<vmem>>, vector<16x4xf32>,
    %cst = arith.constant dense<0.000000e+00> : vector<32x4xf32>
    %7 = tpu.matmul %3, %5, %cst {dimension_numbers = #tpu.dot_dimension_numbers<[1], [0], [0], [1], [0, 0, 1, 1], [], []>} : vector<32x16xf32>, vector<16x4xf32>, vector<32x4xf32> -> vector<32x4xf32>
    %8 = vector.extract_strided_slice %7 {offsets = [0, 0], sizes = [16, 4], strides = [1, 1]} : vector<32x4xf32> to vector<16x4xf32>
    %c0_7 = arith.constant 0 : index
    %c4 = arith.constant 4 : index
    %9 = vector.load %arg8[%c0_7, %c4] : memref<16x20xf32, #tpu.memory_space<vmem>>, vector<16x4xf32>
    tpu.vector_store %arg8[%c0_7, %c4], %8 {strides = array<i32>} : memref<16x20xf32, #tpu.memory_space<vmem>>, vector<16x4xf32>,
    %10 = vector.extract_strided_slice %7 {offsets = [16, 0], sizes = [16, 4], strides = [1, 1]} : vector<32x4xf32> to vector<16x4xf32>
    %c0_8 = arith.constant 0 : index
    %c8 = arith.constant 8 : index
    %11 = vector.load %arg8[%c0_8, %c8] : memref<16x20xf32, #tpu.memory_space<vmem>>, vector<16x4xf32>
    tpu.vector_store %arg8[%c0_8, %c8], %10 {strides = array<i32>} : memref<16x20xf32, #tpu.memory_space<vmem>>, vector<16x4xf32>,
    %12 = vector.extract_strided_slice %7 {offsets = [0, 0], sizes = [16, 4], strides = [1, 1]} : vector<32x4xf32> to vector<16x4xf32>
    %cst_9 = arith.constant dense<0.000000e+00> : vector<32x4xf32>
    %13 = tpu.matmul %3, %12, %cst_9 {dimension_numbers = #tpu.dot_dimension_numbers<[1], [0], [0], [1], [0, 0, 1, 1], [], []>} : vector<32x16xf32>, vector<16x4xf32>, vector<32x4xf32> -> vector<32x4xf32>
    %14 = vector.extract_strided_slice %13 {offsets = [0, 0], sizes = [16, 4], strides = [1, 1]} : vector<32x4xf32> to vector<16x4xf32>
    %c0_10 = arith.constant 0 : index
    %c12 = arith.constant 12 : index
    %15 = vector.load %arg8[%c0_10, %c12] : memref<16x20xf32, #tpu.memory_space<vmem>>, vector<16x4xf32>
    tpu.vector_store %arg8[%c0_10, %c12], %14 {strides = array<i32>} : memref<16x20xf32, #tpu.memory_space<vmem>>, vector<16x4xf32>,
    %16 = vector.extract_strided_slice %13 {offsets = [16, 0], sizes = [16, 4], strides = [1, 1]} : vector<32x4xf32> to vector<16x4xf32>
    %c0_11 = arith.constant 0 : index
    %c16 = arith.constant 16 : index
    %17 = vector.load %arg8[%c0_11, %c16] : memref<16x20xf32, #tpu.memory_space<vmem>>, vector<16x4xf32>
    tpu.vector_store %arg8[%c0_11, %c16], %16 {strides = array<i32>} : memref<16x20xf32, #tpu.memory_space<vmem>>, vector<16x4xf32>,
    %c0_12 = arith.constant 0 : index
    %c0_13 = arith.constant 0 : index
    %18 = vector.load %arg8[%c0_12, %c0_13] : memref<16x20xf32, #tpu.memory_space<vmem>>, vector<16x20xf32>
    %c0_14 = arith.constant 0 : index
    %c0_15 = arith.constant 0 : index
    %19 = vector.load %arg4[%c0_14, %c0_15] : memref<20x128xf32, #tpu.memory_space<vmem>>, vector<20x128xf32>
    %cst_16 = arith.constant dense<0.000000e+00> : vector<16x128xf32>
    %20 = tpu.matmul %18, %19, %cst_16 {dimension_numbers = #tpu.dot_dimension_numbers<[1], [0], [0], [1], [0, 0, 1, 1], [], []>} : vector<16x20xf32>, vector<20x128xf32>, vector<16x128xf32> -> vector<16x128xf32>
    %c0_17 = arith.constant 0 : index
    %c0_18 = arith.constant 0 : index
    %21 = vector.load %arg5[%c0_17, %c0_18] : memref<1x128xf32, #tpu.memory_space<vmem>>, vector<1x128xf32>
    %22 = vector.broadcast %21 : vector<1x128xf32> to vector<16x128xf32>
    %23 = arith.addf %20, %22 : vector<16x128xf32>
    %c0_19 = arith.constant 0 : index
    %c0_20 = arith.constant 0 : index
    %c0_21 = arith.constant 0 : index
    %24 = vector.load %arg6[%c0_19, %c0_20, %c0_21] : memref<1x16x128xf32, #tpu.memory_space<vmem>>, vector<1x16x128xf32>
    %25 = vector.shape_cast %24 : vector<1x16x128xf32> to vector<16x128xf32>
    %26 = vector.shape_cast %23 : vector<16x128xf32> to vector<1x16x128xf32>
    tpu.vector_store %arg6[%c0_19, %c0_20, %c0_21], %26 {strides = array<i32>} : memref<1x16x128xf32, #tpu.memory_space<vmem>>, vector<1x16x128xf32>,
    return
  }
  func.func @transform_0(%arg0: i32, %arg1: i32) -> (i32, i32, i32) {
    %c1_i32 = arith.constant 1 : i32
    %0 = arith.muli %arg0, %c1_i32 : i32
    %1 = arith.addi %0, %arg1 : i32
    %c0_i32 = arith.constant 0 : i32
    %c0_i32_0 = arith.constant 0 : i32
    %c0_i32_1 = arith.constant 0 : i32
    return %1, %c0_i32, %c0_i32_0 : i32, i32, i32
  }
  func.func @transform_2(%arg0: i32, %arg1: i32) -> (i32, i32) {
    %c0_i32 = arith.constant 0 : i32
    %c0_i32_0 = arith.constant 0 : i32
    %c0_i32_1 = arith.constant 0 : i32
    return %c0_i32, %c0_i32_0 : i32, i32
  }
  func.func @transform_3(%arg0: i32, %arg1: i32) -> (i32, i32) {
    %c0_i32 = arith.constant 0 : i32
    %c0_i32_0 = arith.constant 0 : i32
    %c0_i32_1 = arith.constant 0 : i32
    return %c0_i32, %c0_i32_0 : i32, i32
  }
  func.func @transform_4(%arg0: i32, %arg1: i32) -> (i32, i32, i32) {
    %c1_i32 = arith.constant 1 : i32
    %0 = arith.muli %arg0, %c1_i32 : i32
    %1 = arith.addi %0, %arg1 : i32
    %c0_i32 = arith.constant 0 : i32
    %c0_i32_0 = arith.constant 0 : i32
    %c0_i32_1 = arith.constant 0 : i32
    return %1, %c0_i32, %c0_i32_0 : i32, i32, i32
  }
}

</mosaic_0001>

<llo_original>
// kernel: tpu_custom_call.1
$region0: #{tpu_custom_call.1}
  #allocation0 [shape = 'u32[]', space=smem, size = 0x4, offset = 0x4, fixed_abs, tag = 'smem constant byte address 0x4 - core index']
  #allocation1 [shape = 'u32[144,128]{1,0:T(1,128)}', space=vmem, size = 0x12000, scoped, tag = 'internal scratch']
  #allocation2 [shape = 'f32[32,16]{1,0:T(8,128)}', space=vmem, size = 0x4000, scoped, tag = 'scratch operand']
  #allocation3 [shape = 'f32[16,20]{1,0:T(8,128)}', space=vmem, size = 0x2000, scoped, tag = 'scratch operand']
  #allocation7 [shape = 's32[]', space=sflag, size = 0x4, offset = 0, fixed_abs, tag = 'sflag constant byte address 0x0 - dummy sync flag']
  %s0 = inlined_call_operand.vmem [shape: f32[2,16,4], index: 0, kind: input, shape index: {}]
  %s1 = inlined_call_operand.vmem [shape: f32[32,16], index: 1, kind: input, shape index: {}]
  %s2 = inlined_call_operand.vmem [shape: f32[20,128], index: 2, kind: input, shape index: {}]
  %s3 = inlined_call_operand.vmem [shape: f32[1,128], index: 3, kind: input, shape index: {}]
  %s4 = inlined_call_operand.hbm [shape: f32[2,16,128], index: 4, kind: output, shape index: {}]
  %s5 = sld [smem:[#allocation0]]
  $region84: #{tpu_custom_call.1} parent=0
    _
  %s7 = ssub.s32 1, %s5
  %s8 = scalar_select 0, %s7, %s5
  $region1: #{tpu_custom_call.1} parent=0
    #allocation4 [shape = 'u8[16384]{0}', space=vmem, size = 0x4000, scoped, tag = 'output window, operand 0']
    #allocation5 [shape = 's32[2]{0}', space=sflag, size = 0x8, scoped, tag = 'scoped memory for tpu_custom_call.1']
    %9 = vsyncpa [#allocation5], 0
    %s10 = scalar_lea.sflag [#allocation5], 1
    %11 = vsyncpa %s10, 0
    loop: start=0, step=1, limit=4
    $region2: #{tpu_custom_call.1} parent=1 // loop_pre_header
      _
    $region3: #{tpu_custom_call.1} parent=1 // loop_header
      %s13 = sphi 0, %s17
      %p14 = scmp.ge.s32.totalorder %s13, 4
      %s20 = sphi 0, %s32
      %s21 = sphi 0, %s28
      %s22 = sphi 0, %s20
      %s23 = sphi 0, %s21
      %s24 = sphi 0, %s22
      %s25 = sphi 0, %s23
      %s37 = sphi 0, %s39
      %s40 = sphi 0, %s37
      %s41 = sphi 0, %s40
      %s57 = sphi 0, %s41
      %s61 = sphi 0, %s61
      %s63 = sphi 0, %s61
      %s64 = sphi 0, %s63
      %s78 = sphi 0, %s64
      %s82 = sphi 0, %s82
      %s84 = sphi 0, %s82
      %s85 = sphi 0, %s84
      %s99 = sphi 0, %s85
      %s107 = sphi 0, %s109
      %s110 = sphi 0, %s107
      %s111 = sphi 0, %s110
      %s127 = sphi 0, %s111
    $region4: #{tpu_custom_call.1} parent=1 // loop_header_branch
      %16 = sbr.rel (%p14) target = $region8
    $region5: #{tpu_custom_call.1} parent=1 // loop_body
      %s18 = ssub.s32 %s13, 1
      %s19 = ssub.s32 %s13, 2
      %s26 = sadd.s32 1, %s21
      %p27 = scmp.ge.s32.totalorder %s26, 1
      %s28 = scalar_select %p27, 0, %s26
      %s29 = sadd.s32 1, %s20
      %s30 = scalar_select %p27, %s29, %s20
      %p31 = scmp.ge.s32.totalorder %s30, 2
      %s32 = scalar_select %p31, 0, %s30
      %s33 = sadd.s32 %s20, %s21
      %s34 = sadd.s32 %s32, %s28
      %s35 = ssub.s32 %s33, %s34
      %p36 = scmp.eq.s32.totalorder %s35, 0
      %s38 = sadd.s32 %s37, 1
      %s39 = scalar_select %p36, %s37, %s38
      %p42 = pneg %p36
      %p43 = scmp.eq.s32.totalorder %s13, 1
      %p44 = por %p42, %p43
      %p45 = scmp.ne.s32.totalorder %s37, %s40
      %p46 = scmp.eq.s32.totalorder %s13, 0
      %p47 = por %p45, %p46
      %p48 = scmp.ne.s32.totalorder %s37, %s40
      %p49 = scmp.eq.s32.totalorder %s18, 1
      %p50 = por %p48, %p49
      %p51 = scmp.ne.s32.totalorder %s40, %s41
      %p52 = scmp.eq.s32.totalorder %s18, 0
      %p53 = por %p51, %p52
      %p54 = scmp.ne.s32.totalorder %s40, %s41
      %p55 = scmp.eq.s32.totalorder %s19, 1
      %p56 = por %p54, %p55
      %p58 = scmp.ne.s32.totalorder %s41, %s57
      %p59 = scmp.eq.s32.totalorder %s19, 0
      %p60 = por %p58, %p59
      %s62 = sadd.s32 %s61, 1
      %p65 = scmp.eq.s32.totalorder %s13, 1
      %p66 = scmp.ne.s32.totalorder %s61, %s63
      %p67 = scmp.eq.s32.totalorder %s13, 0
      %p68 = por %p66, %p67
      %p69 = scmp.ne.s32.totalorder %s61, %s63
      %p70 = scmp.eq.s32.totalorder %s18, 1
      %p71 = por %p69, %p70
      %p72 = scmp.ne.s32.totalorder %s63, %s64
      %p73 = scmp.eq.s32.totalorder %s18, 0
      %p74 = por %p72, %p73
      %p75 = scmp.ne.s32.totalorder %s63, %s64
      %p76 = scmp.eq.s32.totalorder %s19, 1
      %p77 = por %p75, %p76
      %p79 = scmp.ne.s32.totalorder %s64, %s78
      %p80 = scmp.eq.s32.totalorder %s19, 0
      %p81 = por %p79, %p80
      %s83 = sadd.s32 %s82, 1
      %p86 = scmp.eq.s32.totalorder %s13, 1
      %p87 = scmp.ne.s32.totalorder %s82, %s84
      %p88 = scmp.eq.s32.totalorder %s13, 0
      %p89 = por %p87, %p88
      %p90 = scmp.ne.s32.totalorder %s82, %s84
      %p91 = scmp.eq.s32.totalorder %s18, 1
      %p92 = por %p90, %p91
      %p93 = scmp.ne.s32.totalorder %s84, %s85
      %p94 = scmp.eq.s32.totalorder %s18, 0
      %p95 = por %p93, %p94
      %p96 = scmp.ne.s32.totalorder %s84, %s85
      %p97 = scmp.eq.s32.totalorder %s19, 1
      %p98 = por %p96, %p97
      %p100 = scmp.ne.s32.totalorder %s85, %s99
      %p101 = scmp.eq.s32.totalorder %s19, 0
      %p102 = por %p100, %p101
      %s103 = sadd.s32 %s20, %s21
      %s104 = sadd.s32 %s32, %s28
      %s105 = ssub.s32 %s103, %s104
      %p106 = scmp.eq.s32.totalorder %s105, 0
      %s108 = sadd.s32 %s107, 1
      %s109 = scalar_select %p106, %s107, %s108
      %p112 = pneg %p106
      %p113 = scmp.eq.s32.totalorder %s13, 1
      %p114 = por %p112, %p113
      %p115 = scmp.ne.s32.totalorder %s107, %s110
      %p116 = scmp.eq.s32.totalorder %s13, 0
      %p117 = por %p115, %p116
      %p118 = scmp.ne.s32.totalorder %s107, %s110
      %p119 = scmp.eq.s32.totalorder %s18, 1
      %p120 = por %p118, %p119
      %p121 = scmp.ne.s32.totalorder %s110, %s111
      %p122 = scmp.eq.s32.totalorder %s18, 0
      %p123 = por %p121, %p122
      %p124 = scmp.ne.s32.totalorder %s110, %s111
      %p125 = scmp.eq.s32.totalorder %s19, 1
      %p126 = por %p124, %p125
      %p128 = scmp.ne.s32.totalorder %s111, %s127
      %p129 = scmp.eq.s32.totalorder %s19, 0
      %p130 = por %p128, %p129
      %p131 = scmp.le.s32.totalorder 1, %s13
      %p132 = scmp.lt.s32.totalorder %s13, 3
      %p133 = pnand %p131, %p132
      %p134 = pneg %p133
      // Predicated region
      $region9: #{tpu_custom_call.1} parent=5 // pred_check
        _
      $region10: #{tpu_custom_call.1} parent=5 // pred_check_branch
        %136 = sbr.rel (%p133) target = $region12
      $region11: #{tpu_custom_call.1} parent=5 // pred_region
        %s137 = ssub.s32 %s13, 1
        // Predicated region
        $region13: #{tpu_custom_call.1} parent=11 // pred_check
          %p138 = pneg %p74
        $region14: #{tpu_custom_call.1} parent=11 // pred_check_branch
          %140 = sbr.rel (%p138) target = $region16
        $region15: #{tpu_custom_call.1} parent=11 // pred_region
          _
        $region16: #{tpu_custom_call.1} parent=11 // pred_fallthru
          _
        // Predicated region
        $region17: #{tpu_custom_call.1} parent=11 // pred_check
          %p141 = pneg %p95
        $region18: #{tpu_custom_call.1} parent=11 // pred_check_branch
          %143 = sbr.rel (%p141) target = $region20
        $region19: #{tpu_custom_call.1} parent=11 // pred_region
          _
        $region20: #{tpu_custom_call.1} parent=11 // pred_fallthru
          _
      $region12: #{tpu_custom_call.1} parent=5 // pred_fallthru
        _
      %p144 = scmp.lt.s32.totalorder %s13, 2
      // Predicated region
      $region21: #{tpu_custom_call.1} parent=5 // pred_check
        %p145 = pneg %p144
      $region22: #{tpu_custom_call.1} parent=5 // pred_check_branch
        %147 = sbr.rel (%p145) target = $region24
      $region23: #{tpu_custom_call.1} parent=5 // pred_region
        // Predicated region
        $region25: #{tpu_custom_call.1} parent=23 // pred_check
          %p148 = pneg %p47
        $region26: #{tpu_custom_call.1} parent=23 // pred_check_branch
          %150 = sbr.rel (%p148) target = $region28
        $region27: #{tpu_custom_call.1} parent=23 // pred_region
          %s151 = sadd.s32 %s20, %s21
          %p152 = scmp.lt.s32.totalorder %s151, 1
          %s153 = scalar_select %p152, %s151, 1
          %s154 = smul.addr %s153, 2
          %s155 = smul.addr %s154, 8
          %s156 = scalar_lea.vmem %s0, %s155
          %s157 = sadd.s32 %s20, %s21
        $region28: #{tpu_custom_call.1} parent=23 // pred_fallthru
          _
      $region24: #{tpu_custom_call.1} parent=5 // pred_fallthru
        _
      %p158 = scmp.le.s32.totalorder 1, %s13
      %p159 = scmp.lt.s32.totalorder %s13, 3
      %p160 = pnand %p158, %p159
      %p161 = pneg %p160
      // Predicated region
      $region29: #{tpu_custom_call.1} parent=5 // pred_check
        _
      $region30: #{tpu_custom_call.1} parent=5 // pred_check_branch
        %163 = sbr.rel (%p160) target = $region32
      $region31: #{tpu_custom_call.1} parent=5 // pred_region
        %s164 = ssub.s32 %s13, 1
        %s165 = sadd.s32 %s22, %s23
        %p166 = scmp.lt.s32.totalorder %s165, 1
        %s167 = scalar_select %p166, %s165, 1
        %s168 = smul.addr %s167, 2
        %s169 = smul.addr %s168, 8
        %s170 = scalar_lea.vmem %s0, %s169
        %p171 = pneg %p53
        %p172 = pneg %p50
        %p173 = pneg %p74
        %p174 = pneg %p71
        %p175 = pneg %p95
        %p176 = pneg %p92
        %p177 = pneg %p123
        %p178 = pneg %p120
        %s179 = sand.u32 %s110, 1
        %s180 = scalar_lea.sflag [#allocation5], %s179
        %s181 = sand.u32 %s110, 1
        %s182 = smul.addr %s181, 16
        %s183 = scalar_lea.vmem [#allocation4], %s182
        %s184 = sadd.s32 %s22, %s23
        %p185 = scmp.lt.s32.totalorder %s184, 1
        %s186 = scalar_select %p185, %s184, 1
        %s187 = smul.addr %s186, 2
        %s188 = smul.addr %s187, 8
        %s189 = scalar_lea.vmem %s0, %s188
        %s190 = sadd.s32 %s22, %s23
        %s191 = sadd.s32 %s22, %s23
        %p192 = scmp.eq.s32.totalorder %s23, 0
        // Predicated region
        $region33: #{tpu_custom_call.1} parent=31 // pred_check
          %p193 = pneg %p192
        $region34: #{tpu_custom_call.1} parent=31 // pred_check_branch
          %195 = sbr.rel (%p193) target = $region36
        $region35: #{tpu_custom_call.1} parent=31 // pred_region
          $region37: #{tpu_custom_call.1} parent=35
            #allocation6 [shape = 's32[1]{0}', space=sflag, size = 0x4, scoped, tag = 'scoped memory for tpu_custom_call.1']
            %p197 = scmp.lt.u32.totalorder 32, 8
            %p198 = pneg %p197
            // Predicated region
            $region38: #{tpu_custom_call.1} parent=37 // pred_check
              _
            $region39: #{tpu_custom_call.1} parent=37 // pred_check_branch
              %200 = sbr.rel (%p197) target = $region41
            $region40: #{tpu_custom_call.1} parent=37 // pred_region
              %s215 = sand.u32 32, 7
              %p216 = scmp.eq.s32.totalorder %s215, 0
              // Predicated region
              $region53: #{tpu_custom_call.1} parent=40 // pred_check
                %p217 = pneg %p216
              $region54: #{tpu_custom_call.1} parent=40 // pred_check_branch
                %219 = sbr.rel (%p217) target = $region56
              $region55: #{tpu_custom_call.1} parent=40 // pred_region
                loop: start=0, step=1, limit=1
                $region57: #{tpu_custom_call.1} parent=55 // loop_pre_header
                  _
                $region58: #{tpu_custom_call.1} parent=55 // loop_header
                  %s221 = sphi 0, %s225
                  %p222 = scmp.ge.s32.totalorder %s221, 1
                  %s226 = sphi %s1, %s1
                  %s227 = sphi [#allocation2], [#allocation2]
                $region59: #{tpu_custom_call.1} parent=55 // loop_header_branch
                  %224 = sbr.rel (%p222) target = $region63
                $region60: #{tpu_custom_call.1} parent=55 // loop_body
                  %v228 = vld [vmem:[%s226] sm:$0xff]
                  %229 = vst [vmem:[%s227] sm:$0xff] %v228
                  %v230 = vld [vmem:[%s226 + $0x8] sm:$0xff]
                  %231 = vst [vmem:[%s227 + $0x8] sm:$0xff] %v230
                  %v232 = vld [vmem:[%s226 + $0x10] sm:$0xff]
                  %233 = vst [vmem:[%s227 + $0x10] sm:$0xff] %v232
                  %v234 = vld [vmem:[%s226 + $0x18] sm:$0xff]
                  %235 = vst [vmem:[%s227 + $0x18] sm:$0xff] %v234
                $region61: #{tpu_custom_call.1} parent=55 // loop_footer
                  %s225 = sadd.s32 1, %s221
                $region62: #{tpu_custom_call.1} parent=55 // loop_footer_branch
                  %220 = sbr.rel target = $region58
                $region63: #{tpu_custom_call.1} parent=55 // loop_exit
                  _
              $region56: #{tpu_custom_call.1} parent=40 // pred_fallthru
                _
              %p236 = pneg %p216
              // Predicated region
              $region64: #{tpu_custom_call.1} parent=40 // pred_check
                _
              $region65: #{tpu_custom_call.1} parent=40 // pred_check_branch
                %238 = sbr.rel (%p216) target = $region67
              $region66: #{tpu_custom_call.1} parent=40 // pred_region
                %s239 = sand.u32 32, 7
              $region67: #{tpu_custom_call.1} parent=40 // pred_fallthru
                _
            $region41: #{tpu_custom_call.1} parent=37 // pred_fallthru
              _
            // Predicated region
            $region42: #{tpu_custom_call.1} parent=37 // pred_check
              %p201 = pneg %p197
            $region43: #{tpu_custom_call.1} parent=37 // pred_check_branch
              %203 = sbr.rel (%p201) target = $region45
            $region44: #{tpu_custom_call.1} parent=37 // pred_region
              %s204 = sshllo.u32 0, 32
              loop: start=0, step=1, limit=1
              $region46: #{tpu_custom_call.1} parent=44 // loop_pre_header
                _
              $region47: #{tpu_custom_call.1} parent=44 // loop_header
                %s206 = sphi 0, %s210
                %p207 = scmp.ge.s32.totalorder %s206, 1
                %s211 = sphi %s1, %s1
                %s212 = sphi [#allocation2], [#allocation2]
              $region48: #{tpu_custom_call.1} parent=44 // loop_header_branch
                %209 = sbr.rel (%p207) target = $region52
              $region49: #{tpu_custom_call.1} parent=44 // loop_body
                %v213 = vld [vmem:[%s211] sm:%s204]
                %214 = vst [vmem:[%s212] sm:%s204] %v213
              $region50: #{tpu_custom_call.1} parent=44 // loop_footer
                %s210 = sadd.s32 1, %s206
              $region51: #{tpu_custom_call.1} parent=44 // loop_footer_branch
                %205 = sbr.rel target = $region47
              $region52: #{tpu_custom_call.1} parent=44 // loop_exit
                _
            $region45: #{tpu_custom_call.1} parent=37 // pred_fallthru
              _
            // Predicated region
            $region68: #{tpu_custom_call.1} parent=37 // pred_check
              _
            $region69: #{tpu_custom_call.1} parent=37 // pred_check_branch
              %242 = sbr.rel (0) target = $region71
            $region70: #{tpu_custom_call.1} parent=37 // pred_region
              %243 = vsyncadd [#allocation6], 512
            $region71: #{tpu_custom_call.1} parent=37 // pred_fallthru
              _
            %s244 = smul.u32 32, 1
            %s245 = sshll.u32 %s244, 4
            %246 = dma.done [#allocation6], %s245
        $region36: #{tpu_custom_call.1} parent=31 // pred_fallthru
          _
        %v247 = vld [vmem:[#allocation2] sm:$0xff]
        %v248 = vld [vmem:[#allocation2 + $0x8] sm:$0xff]
        %v249 = vld [vmem:[#allocation2 + $0x10] sm:$0xff]
        %v250 = vld [vmem:[#allocation2 + $0x18] sm:$0xff]
        %v251 = vld [vmem:[%s189] sm:$0xff]
        %v252 = vld [vmem:[%s189 + $0x8] sm:$0xff]
        %vm253 = vcmask 31744
        %254 = vst.msk [vmem:[#allocation3] sm:$0xff] %vm253, %v251
        %255 = vst.msk [vmem:[#allocation3 + $0x8] sm:$0xff] %vm253, %v252
        %vm256 = vcmask 130048
        %v258 = vsel %vm256, %v247, 0
        %v261 = vsel %vm256, %v248, 0
        %v264 = vsel %vm256, %v249, 0
        %v267 = vsel %vm256, %v250, 0
        %269 = vmatprep.subr.mxu0 0.0
        %270 = vmatpush1.msra.mxu0 %v251
        %271 = vmatprep.subr.mxu0 0.0
        %272 = vmatpush1.msra.mxu0 %v252
        %273 = vmatprep.subr.mxu0 0.0
        %274 = vmatpush1.msra.mxu0 0.0
        %275 = vmatprep.subr.mxu0 0.0
        %276 = vmatpush1.msra.mxu0 0.0
        %277 = vmatprep.subr.mxu0 0.0
        %278 = vmatpush1.msra.mxu0 0.0
        %279 = vmatprep.subr.mxu0 0.0
        %280 = vmatpush1.msra.mxu0 0.0
        %281 = vmatprep.subr.mxu0 0.0
        %282 = vmatpush1.msra.mxu0 0.0
        %283 = vmatprep.subr.mxu0 0.0
        %284 = vmatpush1.msra.mxu0 0.0
        %285 = vmatprep.subr.mxu0 0.0
        %286 = vmatpush1.msra.mxu0 0.0
        %287 = vmatprep.subr.mxu0 0.0
        %288 = vmatpush1.msra.mxu0 0.0
        %289 = vmatprep.subr.mxu0 0.0
        %290 = vmatpush1.msra.mxu0 0.0
        %291 = vmatprep.subr.mxu0 0.0
        %292 = vmatpush1.msra.mxu0 0.0
        %293 = vmatprep.subr.mxu0 0.0
        %294 = vmatpush1.msra.mxu0 0.0
        %295 = vmatprep.subr.mxu0 0.0
        %296 = vmatpush1.msra.mxu0 0.0
        %297 = vmatprep.subr.mxu0 0.0
        %298 = vmatpush1.msra.mxu0 0.0
        %299 = vmatprep.subr.mxu0 0.0
        %300 = vmatpush1.msra.mxu0 0.0
        %301 = vmatprep.subr.mxu0 0.0
        %302 = vmatpush1.msra.mxu0 0.0
        %303 = vmatprep.subr.mxu0 0.0
        %304 = vmatpush1.msra.mxu0 0.0
        %305 = vmatprep.subr.mxu0 0.0
        %306 = vmatpush1.msra.mxu0 0.0
        %307 = vmatprep.subr.mxu0 0.0
        %308 = vmatpush1.msra.mxu0 0.0
        %309 = vmatprep.subr.mxu0 0.0
        %310 = vmatpush1.msra.mxu0 0.0
        %311 = vmatprep.subr.mxu0 0.0
        %312 = vmatpush1.msra.mxu0 0.0
        %313 = vmatprep.subr.mxu0 0.0
        %314 = vmatpush1.msra.mxu0 0.0
        %315 = vmatprep.subr.mxu0 0.0
        %316 = vmatpush1.msra.mxu0 0.0
        %317 = vmatprep.subr.mxu0 0.0
        %318 = vmatpush1.msra.mxu0 0.0
        %319 = vmatprep.subr.mxu0 0.0
        %320 = vmatpush1.msra.mxu0 0.0
        %321 = vmatprep.subr.mxu0 0.0
        %322 = vmatpush1.msra.mxu0 0.0
        %323 = vmatprep.subr.mxu0 0.0
        %324 = vmatpush1.msra.mxu0 0.0
        %325 = vmatprep.subr.mxu0 0.0
        %326 = vmatpush1.msra.mxu0 0.0
        %327 = vmatprep.subr.mxu0 0.0
        %328 = vmatpush1.msra.mxu0 0.0
        %329 = vmatprep.subr.mxu0 0.0
        %330 = vmatpush1.msra.mxu0 0.0
        %331 = vmatprep.subr.mxu0 0.0
        %332 = vmatpush1.msra.mxu0 0.0
        %333 = vmatprep.mubr.f32.mxu0 0.0
        %334 = vmatmul.mubr.f32.gmra.mrb[0].mxu0 %v258
        %v335 = vpop.f32.mrb[0].mxu0
        %v336 = vadd.f32 0.0, %v335
        %v337 = vpop.f32.mrb[0].mxu0
        %338 = vmatprep.mubr.f32.mxu0 0.0
        %339 = vmatmul.mubr.f32.gmra.mrb[0].mxu0 %v261
        %v340 = vpop.f32.mrb[0].mxu0
        %v341 = vadd.f32 0.0, %v340
        %v342 = vpop.f32.mrb[0].mxu0
        %343 = vmatprep.mubr.f32.mxu0 0.0
        %344 = vmatmul.mubr.f32.gmra.mrb[0].mxu0 %v264
        %v345 = vpop.f32.mrb[0].mxu0
        %v346 = vadd.f32 0.0, %v345
        %v347 = vpop.f32.mrb[0].mxu0
        %348 = vmatprep.mubr.f32.mxu0 0.0
        %349 = vmatmul.mubr.f32.gmra.mrb[0].mxu0 %v267
        %v350 = vpop.f32.mrb[0].mxu0
        %v351 = vadd.f32 0.0, %v350
        %v352 = vpop.f32.mrb[0].mxu0
        %353 = vdwg.mxu0
        %356 = vrot.lane.b32.xlu0 %v336, 4
        %v357 = vpop.permute.xlu0 %356
        %358 = vrot.lane.b32.xlu0 %v341, 4
        %v359 = vpop.permute.xlu0 %358
        %vm362 = vcmask 64544
        %363 = vst.msk [vmem:[#allocation3] sm:$0xff] %vm362, %v357
        %364 = vst.msk [vmem:[#allocation3 + $0x8] sm:$0xff] %vm362, %v359
        %367 = vrot.lane.b32.xlu0 %v346, 8
        %v368 = vpop.permute.xlu0 %367
        %369 = vrot.lane.b32.xlu0 %v351, 8
        %v370 = vpop.permute.xlu0 %369
        %vm373 = vcmask 97344
        %374 = vst.msk [vmem:[#allocation3] sm:$0xff] %vm373, %v368
        %375 = vst.msk [vmem:[#allocation3 + $0x8] sm:$0xff] %vm373, %v370
        %376 = vmatprep.subr.mxu0 0.0
        %377 = vmatpush1.msra.mxu0 %v336
        %378 = vmatprep.subr.mxu0 0.0
        %379 = vmatpush1.msra.mxu0 %v341
        %380 = vmatprep.subr.mxu0 0.0
        %381 = vmatpush1.msra.mxu0 0.0
        %382 = vmatprep.subr.mxu0 0.0
        %383 = vmatpush1.msra.mxu0 0.0
        %384 = vmatprep.subr.mxu0 0.0
        %385 = vmatpush1.msra.mxu0 0.0
        %386 = vmatprep.subr.mxu0 0.0
        %387 = vmatpush1.msra.mxu0 0.0
        %388 = vmatprep.subr.mxu0 0.0
        %389 = vmatpush1.msra.mxu0 0.0
        %390 = vmatprep.subr.mxu0 0.0
        %391 = vmatpush1.msra.mxu0 0.0
        %392 = vmatprep.subr.mxu0 0.0
        %393 = vmatpush1.msra.mxu0 0.0
        %394 = vmatprep.subr.mxu0 0.0
        %395 = vmatpush1.msra.mxu0 0.0
        %396 = vmatprep.subr.mxu0 0.0
        %397 = vmatpush1.msra.mxu0 0.0
        %398 = vmatprep.subr.mxu0 0.0
        %399 = vmatpush1.msra.mxu0 0.0
        %400 = vmatprep.subr.mxu0 0.0
        %401 = vmatpush1.msra.mxu0 0.0
        %402 = vmatprep.subr.mxu0 0.0
        %403 = vmatpush1.msra.mxu0 0.0
        %404 = vmatprep.subr.mxu0 0.0
        %405 = vmatpush1.msra.mxu0 0.0
        %406 = vmatprep.subr.mxu0 0.0
        %407 = vmatpush1.msra.mxu0 0.0
        %408 = vmatprep.subr.mxu0 0.0
        %409 = vmatpush1.msra.mxu0 0.0
        %410 = vmatprep.subr.mxu0 0.0
        %411 = vmatpush1.msra.mxu0 0.0
        %412 = vmatprep.subr.mxu0 0.0
        %413 = vmatpush1.msra.mxu0 0.0
        %414 = vmatprep.subr.mxu0 0.0
        %415 = vmatpush1.msra.mxu0 0.0
        %416 = vmatprep.subr.mxu0 0.0
        %417 = vmatpush1.msra.mxu0 0.0
        %418 = vmatprep.subr.mxu0 0.0
        %419 = vmatpush1.msra.mxu0 0.0
        %420 = vmatprep.subr.mxu0 0.0
        %421 = vmatpush1.msra.mxu0 0.0
        %422 = vmatprep.subr.mxu0 0.0
        %423 = vmatpush1.msra.mxu0 0.0
        %424 = vmatprep.subr.mxu0 0.0
        %425 = vmatpush1.msra.mxu0 0.0
        %426 = vmatprep.subr.mxu0 0.0
        %427 = vmatpush1.msra.mxu0 0.0
        %428 = vmatprep.subr.mxu0 0.0
        %429 = vmatpush1.msra.mxu0 0.0
        %430 = vmatprep.subr.mxu0 0.0
        %431 = vmatpush1.msra.mxu0 0.0
        %432 = vmatprep.subr.mxu0 0.0
        %433 = vmatpush1.msra.mxu0 0.0
        %434 = vmatprep.subr.mxu0 0.0
        %435 = vmatpush1.msra.mxu0 0.0
        %436 = vmatprep.subr.mxu0 0.0
        %437 = vmatpush1.msra.mxu0 0.0
        %438 = vmatprep.subr.mxu0 0.0
        %439 = vmatpush1.msra.mxu0 0.0
        %440 = vmatprep.mubr.f32.mxu0 0.0
        %441 = vmatmul.mubr.f32.gmra.mrb[0].mxu0 %v258
        %v442 = vpop.f32.mrb[0].mxu0
        %v443 = vadd.f32 0.0, %v442
        %v444 = vpop.f32.mrb[0].mxu0
        %445 = vmatprep.mubr.f32.mxu0 0.0
        %446 = vmatmul.mubr.f32.gmra.mrb[0].mxu0 %v261
        %v447 = vpop.f32.mrb[0].mxu0
        %v448 = vadd.f32 0.0, %v447
        %v449 = vpop.f32.mrb[0].mxu0
        %450 = vmatprep.mubr.f32.mxu0 0.0
        %451 = vmatmul.mubr.f32.gmra.mrb[0].mxu0 %v264
        %v452 = vpop.f32.mrb[0].mxu0
        %v453 = vadd.f32 0.0, %v452
        %v454 = vpop.f32.mrb[0].mxu0
        %455 = vmatprep.mubr.f32.mxu0 0.0
        %456 = vmatmul.mubr.f32.gmra.mrb[0].mxu0 %v267
        %v457 = vpop.f32.mrb[0].mxu0
        %v458 = vadd.f32 0.0, %v457
        %v459 = vpop.f32.mrb[0].mxu0
        %460 = vdwg.mxu0
        %463 = vrot.lane.b32.xlu0 %v443, 12
        %v464 = vpop.permute.xlu0 %463
        %465 = vrot.lane.b32.xlu0 %v448, 12
        %v466 = vpop.permute.xlu0 %465
        %vm469 = vcmask 130144
        %470 = vst.msk [vmem:[#allocation3] sm:$0xff] %vm469, %v464
        %471 = vst.msk [vmem:[#allocation3 + $0x8] sm:$0xff] %vm469, %v466
        %474 = vrot.lane.b32.xlu0 %v453, 16
        %v475 = vpop.permute.xlu0 %474
        %476 = vrot.lane.b32.xlu0 %v458, 16
        %v477 = vpop.permute.xlu0 %476
        %vm480 = vcmask 162944
        %481 = vst.msk [vmem:[#allocation3] sm:$0xff] %vm480, %v475
        %482 = vst.msk [vmem:[#allocation3 + $0x8] sm:$0xff] %vm480, %v477
        %v483 = vld [vmem:[#allocation3] sm:$0xff]
        %v484 = vld [vmem:[#allocation3 + $0x8] sm:$0xff]
        %v485 = vld [vmem:[%s2] sm:$0xff]
        %v486 = vld [vmem:[%s2 + $0x8] sm:$0xff]
        %v487 = vld [vmem:[%s2 + $0x10] sm:$0xf]
        %v488 = vld [vmem:[%s3] sm:$0x1]
        %v490 = vlaneseq
        %v491 = vshrl.u32 %v490, 7
        %v492 = vsub.s32 0, %v491
        %v493 = vrot.slane %v488, %v492
        %vm495 = vcmask 162816
        %v497 = vsel %vm495, %v483, 0
        %v500 = vsel %vm495, %v484, 0
        %vm502 = vcmask 1043456
        %v504 = vsel %vm502, %v487, 0
        %506 = vmatprep.subr.mxu0 0.0
        %507 = vmatpush1.msra.mxu0 %v485
        %508 = vmatprep.subr.mxu0 0.0
        %509 = vmatpush1.msra.mxu0 %v486
        %510 = vmatprep.subr.mxu0 0.0
        %511 = vmatpush1.msra.mxu0 %v504
        %512 = vmatprep.subr.mxu0 0.0
        %513 = vmatpush1.msra.mxu0 0.0
        %514 = vmatprep.subr.mxu0 0.0
        %515 = vmatpush1.msra.mxu0 0.0
        %516 = vmatprep.subr.mxu0 0.0
        %517 = vmatpush1.msra.mxu0 0.0
        %518 = vmatprep.subr.mxu0 0.0
        %519 = vmatpush1.msra.mxu0 0.0
        %520 = vmatprep.subr.mxu0 0.0
        %521 = vmatpush1.msra.mxu0 0.0
        %522 = vmatprep.subr.mxu0 0.0
        %523 = vmatpush1.msra.mxu0 0.0
        %524 = vmatprep.subr.mxu0 0.0
        %525 = vmatpush1.msra.mxu0 0.0
        %526 = vmatprep.subr.mxu0 0.0
        %527 = vmatpush1.msra.mxu0 0.0
        %528 = vmatprep.subr.mxu0 0.0
        %529 = vmatpush1.msra.mxu0 0.0
        %530 = vmatprep.subr.mxu0 0.0
        %531 = vmatpush1.msra.mxu0 0.0
        %532 = vmatprep.subr.mxu0 0.0
        %533 = vmatpush1.msra.mxu0 0.0
        %534 = vmatprep.subr.mxu0 0.0
        %535 = vmatpush1.msra.mxu0 0.0
        %536 = vmatprep.subr.mxu0 0.0
        %537 = vmatpush1.msra.mxu0 0.0
        %538 = vmatprep.subr.mxu0 0.0
        %539 = vmatpush1.msra.mxu0 0.0
        %540 = vmatprep.subr.mxu0 0.0
        %541 = vmatpush1.msra.mxu0 0.0
        %542 = vmatprep.subr.mxu0 0.0
        %543 = vmatpush1.msra.mxu0 0.0
        %544 = vmatprep.subr.mxu0 0.0
        %545 = vmatpush1.msra.mxu0 0.0
        %546 = vmatprep.subr.mxu0 0.0
        %547 = vmatpush1.msra.mxu0 0.0
        %548 = vmatprep.subr.mxu0 0.0
        %549 = vmatpush1.msra.mxu0 0.0
        %550 = vmatprep.subr.mxu0 0.0
        %551 = vmatpush1.msra.mxu0 0.0
        %552 = vmatprep.subr.mxu0 0.0
        %553 = vmatpush1.msra.mxu0 0.0
        %554 = vmatprep.subr.mxu0 0.0
        %555 = vmatpush1.msra.mxu0 0.0
        %556 = vmatprep.subr.mxu0 0.0
        %557 = vmatpush1.msra.mxu0 0.0
        %558 = vmatprep.subr.mxu0 0.0
        %559 = vmatpush1.msra.mxu0 0.0
        %560 = vmatprep.subr.mxu0 0.0
        %561 = vmatpush1.msra.mxu0 0.0
        %562 = vmatprep.subr.mxu0 0.0
        %563 = vmatpush1.msra.mxu0 0.0
        %564 = vmatprep.subr.mxu0 0.0
        %565 = vmatpush1.msra.mxu0 0.0
        %566 = vmatprep.subr.mxu0 0.0
        %567 = vmatpush1.msra.mxu0 0.0
        %568 = vmatprep.subr.mxu0 0.0
        %569 = vmatpush1.msra.mxu0 0.0
        %570 = vmatprep.mubr.f32.mxu0 0.0
        %571 = vmatmul.mubr.f32.gmra.mrb[0].mxu0 %v497
        %v572 = vpop.f32.mrb[0].mxu0
        %v573 = vadd.f32 %v493, %v572
        %v574 = vpop.f32.mrb[0].mxu0
        %575 = vmatprep.mubr.f32.mxu0 0.0
        %576 = vmatmul.mubr.f32.gmra.mrb[0].mxu0 %v500
        %v577 = vpop.f32.mrb[0].mxu0
        %v578 = vadd.f32 %v493, %v577
        %v579 = vpop.f32.mrb[0].mxu0
        %580 = vdwg.mxu0
        %581 = vst [vmem:[%s183] sm:$0xff] %v573
        %582 = vst [vmem:[%s183 + $0x8] sm:$0xff] %v578
        %s583 = sand.u32 %s110, 1
        %s584 = scalar_lea.sflag [#allocation5], %s583
        %s585 = sand.u32 %s110, 1
        %s586 = smul.addr %s585, 16
        %s587 = scalar_lea.vmem [#allocation4], %s586
        // Predicated region
        $region72: #{tpu_custom_call.1} parent=31 // pred_check
          %p588 = pneg %p120
        $region73: #{tpu_custom_call.1} parent=31 // pred_check_branch
          %590 = sbr.rel (%p588) target = $region75
        $region74: #{tpu_custom_call.1} parent=31 // pred_region
          %s591 = sadd.s32 %s22, %s23
          %s593 = ssub.s32 256, 256
          %594 = vsyncadd %s584, %s593
          %s595 = smul.addr %s591, 2
          %s596 = smul.addr %s595, 128
          %s597 = scalar_lea.hbm %s4, %s596
          %s598 = sshll.u32 %s587, 4
          %s599 = int_to_ptr.vmem [resolvable:$true] %s598
          %604 = dma.vmem_to_hbm [thread:$0]  %s599, 256, %s597, %s584, 128, 128, 8
        $region75: #{tpu_custom_call.1} parent=31 // pred_fallthru
          _
      $region32: #{tpu_custom_call.1} parent=5 // pred_fallthru
        _
      %p605 = scmp.le.s32.totalorder 2, %s13
      // Predicated region
      $region76: #{tpu_custom_call.1} parent=5 // pred_check
        %p606 = pneg %p605
      $region77: #{tpu_custom_call.1} parent=5 // pred_check_branch
        %608 = sbr.rel (%p606) target = $region79
      $region78: #{tpu_custom_call.1} parent=5 // pred_region
        %s609 = ssub.s32 %s13, 2
        // Predicated region
        $region80: #{tpu_custom_call.1} parent=78 // pred_check
          %p610 = pneg %p126
        $region81: #{tpu_custom_call.1} parent=78 // pred_check_branch
          %612 = sbr.rel (%p610) target = $region83
        $region82: #{tpu_custom_call.1} parent=78 // pred_region
          %s613 = sand.u32 %s111, 1
          %s614 = scalar_lea.sflag [#allocation5], %s613
          %s615 = sand.u32 %s111, 1
          %s616 = smul.addr %s615, 16
          %s617 = scalar_lea.vmem [#allocation4], %s616
          %618 = dma.done %s614, 256
        $region83: #{tpu_custom_call.1} parent=78 // pred_fallthru
          _
      $region79: #{tpu_custom_call.1} parent=5 // pred_fallthru
        _
    $region6: #{tpu_custom_call.1} parent=1 // loop_footer
      %s17 = sadd.s32 1, %s13
    $region7: #{tpu_custom_call.1} parent=1 // loop_footer_branch
      %12 = sbr.rel target = $region3
    $region8: #{tpu_custom_call.1} parent=1 // loop_exit
      _
    %619 = vsyncpa [#allocation5], 1
    %s620 = scalar_lea.sflag [#allocation5], 1
    %621 = vsyncpa %s620, 1

</llo_original>
